<compile_context>
chip_gen: v7x
topology: tpu7x:2x2x1
jax: 0.10.0
libtpu: 0.0.40
codegen_flags: <defaults>
</compile_context>

<pallas_src>
import functools
import math

import jax
import jax.numpy as jnp
from jax.experimental import pallas as pl
from jax.experimental.pallas import tpu as pltpu


def _cdiv(a, b):
    return -(-a // b)


def _round_up(x, m):
    return _cdiv(x, m) * m


def _xlogx(v):
    # xlogy convention: 0 * log(0) == 0 (keeps alpha==0 / alpha==1 finite).
    return 0.0 if v <= 0.0 else v * math.log(v)


def _vmem_budget():
    """(per-input-buffer byte budget, scoped vmem_limit_bytes), generation-aware."""
    cap = None
    try:
        info = pltpu.get_tpu_info()
        cap = int(getattr(info, "vmem_capacity_bytes", 0)) or None
    except Exception:
        cap = None
    if cap is None:
        cap = 64 * 1024 * 1024            # conservative fallback (v7x-sized VMEM)
    per_buffer = cap // 8                 # 16 MiB on 128-MiB parts, 8 MiB on v7x
    vmem_limit = min(cap // 2, 64 * 1024 * 1024)
    return per_buffer, vmem_limit


def _label_smooth_loss_kernel(x_ref, t_ref, o_ref, *, batch, block_rows,
                              num_classes, tiles_per_core, coef_all, coef_tgt,
                              mask_lanes):
    """One batch tile: fused log-softmax stats + smoothed-KL/NLL partial sums.

    x_ref : (TB, Cp) logits (native dtype) in VMEM (Cp = round_up(C, 128))
    t_ref : (TB, 1)  int32 class indices in VMEM
    o_ref : (8, 128) float32 per-core running accumulator (output block,
            resident across the inner "arbitrary" grid axis)
    """
    c = pl.program_id(0)          # core slice (parallel axis)
    i = pl.program_id(1)          # tile within this core's slice (arbitrary)
    tile_idx = c * tiles_per_core + i

    @pl.when(i == 0)
    def _():
        o_ref[...] = jnp.zeros_like(o_ref)

    x = x_ref[...].astype(jnp.float32)                      # (TB, Cp)
    t = t_ref[...]                                          # (TB, 1) int32
    col = jax.lax.broadcasted_iota(jnp.int32, x.shape, 1)   # (TB, Cp)

    # Row-wise log-softmax statistics without materializing logprobs.
    # One subtraction pass d = x - m feeds all three reductions.
    if mask_lanes:
        lane_ok = col < num_classes
        m = jnp.max(jnp.where(lane_ok, x, -jnp.inf), axis=-1, keepdims=True)
        d = x - m
        sum_d = jnp.sum(jnp.where(lane_ok, d, 0.0), axis=-1, keepdims=True)
        sum_e = jnp.sum(jnp.where(lane_ok, jnp.exp(d), 0.0), axis=-1,
                        keepdims=True)
    else:
        m = jnp.max(x, axis=-1, keepdims=True)
        d = x - m
        sum_d = jnp.sum(d, axis=-1, keepdims=True)
        sum_e = jnp.sum(jnp.exp(d), axis=-1, keepdims=True)
    sel = jnp.sum(jnp.where(col == t, d, 0.0), axis=-1, keepdims=True)

    lse = jnp.log(sum_e)                                    # (TB, 1)
    row_lp_sum = sum_d - jnp.float32(num_classes) * lse     # sum_c logprob_c
    lp_tgt = sel - lse                                      # logprob[target]

    # NaN/Inf-safe masking of padded/phantom rows (select, not multiply).
    row = jax.lax.broadcasted_iota(jnp.int32, (block_rows, 1), 0)
    valid = (row + tile_idx * block_rows) < batch
    row_lp_sum = jnp.where(valid, row_lp_sum, 0.0)
    lp_tgt = jnp.where(valid, lp_tgt, 0.0)

    partial = (jnp.float32(coef_all) * jnp.sum(row_lp_sum)
               + jnp.float32(coef_tgt) * jnp.sum(lp_tgt))
    o_ref[...] += partial


def label_smooth_loss(logits, target, alpha=0.2, gamma=0.2, block_rows=None):
    """Pallas-backed equivalent of LabelSmoothLoss(alpha, gamma, 'mean').forward."""
    B, C = logits.shape
    conf = 1.0 - alpha

    itemsize = jnp.dtype(logits.dtype).itemsize
    sub = max(8, 32 // itemsize)              # native sublane tile: 8/16/32
    Cp = _round_up(C, 128)                    # lane-padded block width

    per_buffer, vmem_limit = _vmem_budget()
    bytes_per_row = max(Cp * itemsize, 1)
    rows_budget = max(sub, (per_buffer // bytes_per_row) // sub * sub)
    tb = min(_round_up(B, sub), rows_budget)
    if block_rows is not None:
        tb = min(tb, _round_up(block_rows, sub))
    tb = max(tb, sub)

    num_blocks = _cdiv(B, tb)
    num_cores = 2 if num_blocks > 1 else 1    # megacore split (no-op on 1 TC)
    tiles_per_core = _cdiv(num_blocks, num_cores)

    t = target.astype(jnp.int32).reshape(B, 1)

    # Compile-time scalars from the exact algebraic reduction of the KL term:
    #   sum(onehot*(log(onehot)-logprobs))
    #     = B*[(C-1)*a*log(a) + conf*log(conf)] - a*S_all - (conf-a)*S_tgt
    #   loss = -S_tgt/B + gamma * KL / (B*C)
    const_kl_row = (C - 1) * _xlogx(alpha) + _xlogx(conf)
    coef_tgt = -(1.0 / B) - gamma * (conf - alpha) / (B * C)
    coef_all = -gamma * alpha / (B * C)
    const_term = gamma * const_kl_row / C

    kernel = functools.partial(
        _label_smooth_loss_kernel,
        batch=B, block_rows=tb, num_classes=C, tiles_per_core=tiles_per_core,
        coef_all=coef_all, coef_tgt=coef_tgt, mask_lanes=(Cp != C))

    def in_map(c, i):
        # Clamp phantom tiles (odd tile count split over 2 cores) to the last
        # real block; their rows are fully masked out in the kernel.
        return (jnp.minimum(c * tiles_per_core + i, num_blocks - 1), 0)

    out = pl.pallas_call(
        kernel,
        out_shape=jax.ShapeDtypeStruct((num_cores * 8, 128), jnp.float32),
        grid=(num_cores, tiles_per_core),
        in_specs=[
            pl.BlockSpec((tb, Cp), in_map),
            pl.BlockSpec((tb, 1), in_map),
        ],
        out_specs=pl.BlockSpec((8, 128), lambda c, i: (c, 0)),
        compiler_params=pltpu.CompilerParams(
            dimension_semantics=("parallel", "arbitrary"),
            vmem_limit_bytes=int(vmem_limit)),
    )(logits, t)

    partials = out.reshape(num_cores, 8, 128)[:, 0, 0]
    return jnp.sum(partials) + jnp.float32(const_term)


def _reference(logits, target, alpha=0.2, gamma=0.2):
    """Plain-JAX reference mirroring the PyTorch module."""
    B, C = logits.shape
    conf = 1.0 - alpha
    logprobs = jax.nn.log_softmax(logits.astype(jnp.float32), axis=1)
    onehot = jnp.full((B, C), alpha, jnp.float32)
    onehot = onehot.at[jnp.arange(B), target].set(conf)
    kl = jnp.sum(onehot * (jnp.log(onehot) - logprobs)) / B / C
    nll = -jnp.mean(logprobs[jnp.arange(B), target])
    return nll + gamma * kl


if __name__ == "__main__":
    key = jax.random.PRNGKey(0)
    k1, k2, k3, k4, k5, k6, k7, k8 = jax.random.split(key, 8)

    # Case 1: single tile, single core, C multiple of 128.
    B, C = 8, 128
    logits = jax.random.normal(k1, (B, C), dtype=jnp.float32)
    target = jax.random.randint(k2, (B,), 0, C, dtype=jnp.int32)
    loss = jax.block_until_ready(label_smooth_loss(logits, target, 0.2, 0.2))
    ref = _reference(logits, target, 0.2, 0.2)
    assert jnp.allclose(loss, ref, rtol=1e-5, atol=1e-5), (loss, ref)

    # Case 2: multi-tile + 2-core split + ragged last tile + phantom tile
    # (B=20, tb=8 -> 3 real tiles split as 2+2 with one phantom, clamped).
    B2, C2 = 20, 384
    logits2 = jax.random.normal(k3, (B2, C2), dtype=jnp.float32)
    target2 = jax.random.randint(k4, (B2,), 0, C2, dtype=jnp.int32)
    loss2 = jax.block_until_ready(
        label_smooth_loss(logits2, target2, 0.2, 0.2, block_rows=8))
    ref2 = _reference(logits2, target2, 0.2, 0.2)
    assert jnp.allclose(loss2, ref2, rtol=1e-5, atol=1e-5), (loss2, ref2)

    # Case 3: C not a multiple of 128 -> in-kernel lane masking path.
    B3, C3 = 16, 200
    logits3 = jax.random.normal(k5, (B3, C3), dtype=jnp.float32)
    target3 = jax.random.randint(k6, (B3,), 0, C3, dtype=jnp.int32)
    loss3 = jax.block_until_ready(label_smooth_loss(logits3, target3, 0.2, 0.2))
    ref3 = _reference(logits3, target3, 0.2, 0.2)
    assert jnp.allclose(loss3, ref3, rtol=1e-5, atol=1e-5), (loss3, ref3)

    # Case 4: bfloat16 logits -> dtype-aware (16-row) sublane tiling,
    # ragged batch rows masked in-kernel.
    B4, C4 = 20, 128
    logits4 = jax.random.normal(k7, (B4, C4), dtype=jnp.bfloat16)
    target4 = jax.random.randint(k8, (B4,), 0, C4, dtype=jnp.int32)
    loss4 = jax.block_until_ready(label_smooth_loss(logits4, target4, 0.2, 0.2))
    ref4 = _reference(logits4, target4, 0.2, 0.2)
    assert jnp.allclose(loss4, ref4, rtol=1e-5, atol=1e-5), (loss4, ref4)

    print("KERNEL_OK")
</pallas_src>

<mosaic_0001>
module attributes {stable_mosaic.version = 11 : i64} {
  func.func @_label_smooth_loss_kernel(%arg0: i32, %arg1: i32, %arg2: memref<8x128xf32, #tpu.memory_space<vmem>>, %arg3: memref<8x1xi32, #tpu.memory_space<vmem>>, %arg4: memref<8x128xf32, #tpu.memory_space<vmem>>) attributes {dimension_semantics = [#tpu.dimension_semantics<parallel>, #tpu.dimension_semantics<arbitrary>], iteration_bounds = array<i64: 1, 1>, scalar_prefetch = 0 : i64, scratch_operands = 0 : i64, tpu.core_type = #tpu.core_type<tc>, window_params = [{transform_indices = @transform_0, window_bounds = array<i64: 8, 128>}, {transform_indices = @transform_1, window_bounds = array<i64: 8, 1>}, {transform_indices = @transform_2, window_bounds = array<i64: 8, 128>}]} {
    %c1_i32 = arith.constant 1 : i32
    %0 = arith.muli %arg0, %c1_i32 : i32
    %1 = arith.addi %0, %arg1 : i32
    %c0_i32 = arith.constant 0 : i32
    %2 = arith.cmpi eq, %arg1, %c0_i32 : i32
    %3 = arith.extui %2 : i1 to i32
    %c0_i32_0 = arith.constant 0 : i32
    %4 = arith.cmpi ne, %3, %c0_i32_0 : i32
    scf.if %4 {
      %cst_20 = arith.constant 0.000000e+00 : f32
      %53 = vector.broadcast %cst_20 : f32 to vector<8x128xf32>
      %c0_21 = arith.constant 0 : index
      %c0_22 = arith.constant 0 : index
      %54 = vector.load %arg4[%c0_21, %c0_22] : memref<8x128xf32, #tpu.memory_space<vmem>>, vector<8x128xf32>
      tpu.vector_store %arg4[%c0_21, %c0_22], %53 {strides = array<i32>} : memref<8x128xf32, #tpu.memory_space<vmem>>, vector<8x128xf32>,
    } else {
    }
    %c0 = arith.constant 0 : index
    %c0_1 = arith.constant 0 : index
    %5 = vector.load %arg2[%c0, %c0_1] : memref<8x128xf32, #tpu.memory_space<vmem>>, vector<8x128xf32>
    %c0_2 = arith.constant 0 : index
    %c0_3 = arith.constant 0 : index
    %6 = vector.load %arg3[%c0_2, %c0_3] : memref<8x1xi32, #tpu.memory_space<vmem>>, vector<8x1xi32>
    %7 = tpu.iota {dimensions = array<i32: 1>} : vector<8x128xi32>
    %cst = arith.constant dense<0xFF800000> : vector<8xf32>
    %8 = vector.multi_reduction <maximumf>, %5, %cst [1] : vector<8x128xf32> to vector<8xf32>
    %9 = vector.shape_cast %8 : vector<8xf32> to vector<8x1xf32>
    %10 = vector.broadcast %9 : vector<8x1xf32> to vector<8x128xf32>
    %11 = arith.subf %5, %10 : vector<8x128xf32>
    %cst_4 = arith.constant dense<0.000000e+00> : vector<8xf32>
    %12 = vector.multi_reduction <add>, %11, %cst_4 [1] : vector<8x128xf32> to vector<8xf32>
    %13 = vector.shape_cast %12 : vector<8xf32> to vector<8x1xf32>
    %14 = math.exp %11 : vector<8x128xf32>
    %cst_5 = arith.constant dense<0.000000e+00> : vector<8xf32>
    %15 = vector.multi_reduction <add>, %14, %cst_5 [1] : vector<8x128xf32> to vector<8xf32>
    %16 = vector.shape_cast %15 : vector<8xf32> to vector<8x1xf32>
    %17 = vector.broadcast %6 : vector<8x1xi32> to vector<8x128xi32>
    %18 = arith.cmpi eq, %7, %17 : vector<8x128xi32>
    %cst_6 = arith.constant 0.000000e+00 : f32
    %19 = vector.broadcast %cst_6 : f32 to vector<8x128xf32>
    %20 = arith.select %18, %11, %19 : vector<8x128xi1>, vector<8x128xf32>
    %cst_7 = arith.constant dense<0.000000e+00> : vector<8xf32>
    %21 = vector.multi_reduction <add>, %20, %cst_7 [1] : vector<8x128xf32> to vector<8xf32>
    %22 = vector.shape_cast %21 : vector<8xf32> to vector<8x1xf32>
    %23 = math.log %16 : vector<8x1xf32>
    %cst_8 = arith.constant 1.280000e+02 : f32
    %24 = vector.broadcast %cst_8 : f32 to vector<8x1xf32>
    %25 = arith.mulf %24, %23 : vector<8x1xf32>
    %26 = arith.subf %13, %25 : vector<8x1xf32>
    %27 = arith.subf %22, %23 : vector<8x1xf32>
    %28 = tpu.iota {dimensions = array<i32: 0>} : vector<8x1xi32>
    %c8_i32 = arith.constant 8 : i32
    %29 = arith.muli %1, %c8_i32 : i32
    %30 = vector.broadcast %29 : i32 to vector<8x1xi32>
    %31 = arith.addi %28, %30 : vector<8x1xi32>
    %c8_i32_9 = arith.constant 8 : i32
    %32 = vector.broadcast %c8_i32_9 : i32 to vector<8x1xi32>
    %33 = arith.cmpi slt, %31, %32 : vector<8x1xi32>
    %cst_10 = arith.constant 0.000000e+00 : f32
    %34 = vector.broadcast %cst_10 : f32 to vector<8x1xf32>
    %35 = arith.select %33, %26, %34 : vector<8x1xi1>, vector<8x1xf32>
    %cst_11 = arith.constant 0.000000e+00 : f32
    %36 = vector.broadcast %cst_11 : f32 to vector<8x1xf32>
    %37 = arith.select %33, %27, %36 : vector<8x1xi1>, vector<8x1xf32>
    %38 = vector.shape_cast %35 : vector<8x1xf32> to vector<1x8x1xf32>
    %cst_12 = arith.constant dense<0.000000e+00> : vector<1xf32>
    %39 = vector.multi_reduction <add>, %38, %cst_12 [1, 2] : vector<1x8x1xf32> to vector<1xf32>
    %40 = vector.shape_cast %39 : vector<1xf32> to vector<1x1x1xf32>
    %41 = vector.extract %40[0, 0, 0] : f32 from vector<1x1x1xf32>
    %cst_13 = arith.constant -3.906250e-05 : f32
    %42 = arith.mulf %cst_13, %41 : f32
    %43 = vector.shape_cast %37 : vector<8x1xf32> to vector<1x8x1xf32>
    %cst_14 = arith.constant dense<0.000000e+00> : vector<1xf32>
    %44 = vector.multi_reduction <add>, %43, %cst_14 [1, 2] : vector<1x8x1xf32> to vector<1xf32>
    %45 = vector.shape_cast %44 : vector<1xf32> to vector<1x1x1xf32>
    %46 = vector.extract %45[0, 0, 0] : f32 from vector<1x1x1xf32>
    %cst_15 = arith.constant -0.125117183 : f32
    %47 = arith.mulf %cst_15, %46 : f32
    %48 = arith.addf %42, %47 : f32
    %c0_16 = arith.constant 0 : index
    %c0_17 = arith.constant 0 : index
    %49 = vector.load %arg4[%c0_16, %c0_17] : memref<8x128xf32, #tpu.memory_space<vmem>>, vector<8x128xf32>
    %50 = vector.broadcast %48 : f32 to vector<8x128xf32>
    %51 = arith.addf %49, %50 : vector<8x128xf32>
    %c0_18 = arith.constant 0 : index
    %c0_19 = arith.constant 0 : index
    %52 = vector.load %arg4[%c0_18, %c0_19] : memref<8x128xf32, #tpu.memory_space<vmem>>, vector<8x128xf32>
    tpu.vector_store %arg4[%c0_18, %c0_19], %51 {strides = array<i32>} : memref<8x128xf32, #tpu.memory_space<vmem>>, vector<8x128xf32>,
    return
  }
  func.func @transform_0(%arg0: i32, %arg1: i32) -> (i32, i32) {
    %c1_i32 = arith.constant 1 : i32
    %0 = arith.muli %arg0, %c1_i32 : i32
    %1 = arith.addi %0, %arg1 : i32
    %c0_i32 = arith.constant 0 : i32
    %2 = arith.minsi %1, %c0_i32 : i32
    %c0_i32_0 = arith.constant 0 : i32
    %c0_i32_1 = arith.constant 0 : i32
    return %2, %c0_i32_0 : i32, i32
  }
  func.func @transform_1(%arg0: i32, %arg1: i32) -> (i32, i32) {
    %c1_i32 = arith.constant 1 : i32
    %0 = arith.muli %arg0, %c1_i32 : i32
    %1 = arith.addi %0, %arg1 : i32
    %c0_i32 = arith.constant 0 : i32
    %2 = arith.minsi %1, %c0_i32 : i32
    %c0_i32_0 = arith.constant 0 : i32
    %c0_i32_1 = arith.constant 0 : i32
    return %2, %c0_i32_0 : i32, i32
  }
  func.func @transform_2(%arg0: i32, %arg1: i32) -> (i32, i32) {
    %c0_i32 = arith.constant 0 : i32
    %c0_i32_0 = arith.constant 0 : i32
    return %arg0, %c0_i32 : i32, i32
  }
}

</mosaic_0001>

<llo_original>
// kernel: tpu_custom_call.1
$region0: #{tpu_custom_call.1}
  #allocation0 [shape = 'u32[]', space=smem, size = 0x4, offset = 0x4, fixed_abs, tag = 'smem constant byte address 0x4 - core index']
  #allocation1 [shape = 'u32[144,128]{1,0:T(1,128)}', space=vmem, size = 0x12000, scoped, tag = 'internal scratch']
  %s0 = inlined_call_operand.vmem [shape: f32[8,128], index: 0, kind: input, shape index: {}]
  %s1 = inlined_call_operand.vmem [shape: s32[8,1], index: 1, kind: input, shape index: {}]
  %s2 = inlined_call_operand.hbm [shape: f32[8,128], index: 2, kind: output, shape index: {}]
  %s3 = sld [smem:[#allocation0]]
  $region22: #{tpu_custom_call.1} parent=0
    _
  %s5 = ssub.s32 1, %s3
  %s6 = scalar_select 0, %s5, %s3
  $region1: #{tpu_custom_call.1} parent=0
    #allocation2 [shape = 'u8[4096]{0}', space=vmem, size = 0x1000, scoped, tag = 'output window, operand 0, single buffered']
    #allocation3 [shape = 's32[1]{0}', space=sflag, size = 0x4, scoped, tag = 'scoped memory for tpu_custom_call.1']
    %7 = vsyncpa [#allocation3], 0
    // Predicated region
    $region2: #{tpu_custom_call.1} parent=1 // pred_check
      _
    $region3: #{tpu_custom_call.1} parent=1 // pred_check_branch
      %9 = sbr.rel (0) target = $region5
    $region4: #{tpu_custom_call.1} parent=1 // pred_region
      %s10 = sadd.s32 0, 0
      %p11 = scmp.lt.s32.totalorder %s10, 0
      %s12 = scalar_select %p11, %s10, 0
      %p13 = scmp.lt.s32.totalorder %s12, 0
      %s14 = scalar_select %p13, %s12, 0
      %s15 = smul.addr %s14, 8
      %s16 = scalar_lea.vmem %s0, %s15
      %s17 = sadd.s32 0, 0
      %p18 = scmp.lt.s32.totalorder %s17, 0
      %s19 = scalar_select %p18, %s17, 0
    $region5: #{tpu_custom_call.1} parent=1 // pred_fallthru
      _
    // Predicated region
    $region6: #{tpu_custom_call.1} parent=1 // pred_check
      _
    $region7: #{tpu_custom_call.1} parent=1 // pred_check_branch
      %21 = sbr.rel (0) target = $region9
    $region8: #{tpu_custom_call.1} parent=1 // pred_region
      %s22 = sadd.s32 0, 0
      %p23 = scmp.lt.s32.totalorder %s22, 0
      %s24 = scalar_select %p23, %s22, 0
      %p25 = scmp.lt.s32.totalorder %s24, 0
      %s26 = scalar_select %p25, %s24, 0
      %s27 = smul.addr %s26, 8
      %s28 = scalar_lea.vmem %s1, %s27
      %s29 = sadd.s32 0, 0
      %p30 = scmp.lt.s32.totalorder %s29, 0
      %s31 = scalar_select %p30, %s29, 0
    $region9: #{tpu_custom_call.1} parent=1 // pred_fallthru
      _
    %s32 = sadd.s32 0, 0
    %p33 = scmp.lt.s32.totalorder %s32, 0
    %s34 = scalar_select %p33, %s32, 0
    %p35 = scmp.lt.s32.totalorder %s34, 0
    %s36 = scalar_select %p35, %s34, 0
    %s37 = smul.addr %s36, 8
    %s38 = scalar_lea.vmem %s0, %s37
    %s39 = sadd.s32 0, 0
    %p40 = scmp.lt.s32.totalorder %s39, 0
    %s41 = scalar_select %p40, %s39, 0
    %p42 = scmp.lt.s32.totalorder %s41, 0
    %s43 = scalar_select %p42, %s41, 0
    %s44 = smul.addr %s43, 8
    %s45 = scalar_lea.vmem %s1, %s44
    %s46 = sadd.s32 0, 0
    %p47 = scmp.lt.s32.totalorder %s46, 0
    %s48 = scalar_select %p47, %s46, 0
    %p49 = scmp.lt.s32.totalorder %s48, 0
    %s50 = scalar_select %p49, %s48, 0
    %s51 = smul.addr %s50, 8
    %s52 = scalar_lea.vmem %s0, %s51
    %s53 = sadd.s32 0, 0
    %p54 = scmp.lt.s32.totalorder %s53, 0
    %s55 = scalar_select %p54, %s53, 0
    %s56 = sadd.s32 0, 0
    %p57 = scmp.lt.s32.totalorder %s56, 0
    %s58 = scalar_select %p57, %s56, 0
    %p59 = scmp.lt.s32.totalorder %s58, 0
    %s60 = scalar_select %p59, %s58, 0
    %s61 = smul.addr %s60, 8
    %s62 = scalar_lea.vmem %s1, %s61
    %s63 = sadd.s32 0, 0
    %p64 = scmp.lt.s32.totalorder %s63, 0
    %s65 = scalar_select %p64, %s63, 0
    %s66 = sadd.s32 0, 0
    %p67 = scmp.eq.s32.totalorder 0, 0
    // Predicated region
    $region10: #{tpu_custom_call.1} parent=1 // pred_check
      %p68 = pneg %p67
    $region11: #{tpu_custom_call.1} parent=1 // pred_check_branch
      %70 = sbr.rel (%p68) target = $region13
    $region12: #{tpu_custom_call.1} parent=1 // pred_region
      %71 = vst [vmem:[#allocation2] sm:$0xff] 0.0
    $region13: #{tpu_custom_call.1} parent=1 // pred_fallthru
      _
    %v72 = vld [vmem:[%s52] sm:$0xff]
    %v73 = vld [vmem:[%s62] sm:$0xff]
    %v74 = vlaneseq
    %v75 = vand.u32 %v74, 127
    %76 = vmax.xlane.f32.xlu0 %v72
    %v77 = vpop.xlane.xlu0 %76
    %v78 = vsub.f32 %v72, %v77
    %79 = vadd.xlane.f32.xlu0 %v78
    %v80 = vpop.xlane.xlu0 %79
    %v81 = vmul.f32 %v78, 1.442695
    %v82 = vpow.pop %v81
    %83 = vadd.xlane.f32.xlu0 %v82
    %v84 = vpop.xlane.xlu0 %83
    %85 = vset.pattern.permute.xlu0 0
    %86 = vperm.xlu0 %85, %v73
    %v87 = vpop.permute.xlu0 %86
    %vm88 = vcmp.eq.s32.totalorder %v75, %v87
    %v89 = vsel %vm88, %v78, 0.0
    %90 = vadd.xlane.f32.xlu0 %v89
    %v91 = vpop.xlane.xlu0 %90
    %v92 = vlog2.pop %v84
    %v93 = vmul.f32 %v92, 0.6931472
    %v94 = vmul.f32 %v93, 128.0
    %v95 = vsub.f32 %v80, %v94
    %v96 = vsub.f32 %v91, %v93
    %v97 = vlaneseq
    %v98 = vshrl.u32 %v97, 7
    %s99 = smul.u32 %s66, 8
    %v100 = vstv %s99
    %v101 = vadd.s32 %v98, %v100
    %vm102 = vcmp.lt.s32.totalorder %v101, 8
    %v103 = vsel %vm102, %v95, 0.0
    %v104 = vsel %vm102, %v96, 0.0
    %vm105 = vcmask 7168
    %v106 = vsel %vm105, %v103, 0.0
    %107 = vadd.xlane.f32.xlu0 %v106
    %v108 = vpop.xlane.xlu0 %107
    %v109 = vrot.slane %v108, 4
    %v110 = vadd.f32 %v108, %v109
    %v111 = vrot.slane %v110, 2
    %v112 = vadd.f32 %v110, %v111
    %v113 = vrot.slane %v112, 1
    %v114 = vadd.f32 %v112, %v113
    %s115 = vtos %v114
    %s116 = smul.f32 %s115, -3.90625e-05
    %v117 = vsel %vm105, %v104, 0.0
    %118 = vadd.xlane.f32.xlu0 %v117
    %v119 = vpop.xlane.xlu0 %118
    %v120 = vrot.slane %v119, 4
    %v121 = vadd.f32 %v119, %v120
    %v122 = vrot.slane %v121, 2
    %v123 = vadd.f32 %v121, %v122
    %v124 = vrot.slane %v123, 1
    %v125 = vadd.f32 %v123, %v124
    %s126 = vtos %v125
    %s127 = smul.f32 %s126, -0.12511718
    %s128 = sadd.f32 %s116, %s127
    %v129 = vld [vmem:[#allocation2] sm:$0xff]
    %v130 = vstv %s128
    %v131 = vadd.f32 %v129, %v130
    %132 = vst [vmem:[#allocation2] sm:$0xff] %v131
    // Predicated region
    $region14: #{tpu_custom_call.1} parent=1 // pred_check
      _
    $region15: #{tpu_custom_call.1} parent=1 // pred_check_branch
      %134 = sbr.rel (0) target = $region17
    $region16: #{tpu_custom_call.1} parent=1 // pred_region
      %s136 = ssub.s32 128, 128
      %137 = vsyncadd [#allocation3], %s136
      %s139 = sshll.u32 [#allocation2], 4
      %s140 = int_to_ptr.vmem [resolvable:$true] %s139
      %142 = dma.vmem_to_hbm [thread:$0]  %s140, 128, %s2, [#allocation3]
    $region17: #{tpu_custom_call.1} parent=1 // pred_fallthru
      _
    // Predicated region
    $region18: #{tpu_custom_call.1} parent=1 // pred_check
      _
    $region19: #{tpu_custom_call.1} parent=1 // pred_check_branch
      %144 = sbr.rel (0) target = $region21
    $region20: #{tpu_custom_call.1} parent=1 // pred_region
      %145 = dma.done [#allocation3], 128
    $region21: #{tpu_custom_call.1} parent=1 // pred_fallthru
      _
    %146 = vsyncpa [#allocation3], 1

</llo_original>
